<compile_context>
chip_gen: v7x
topology: tpu7x:2x2x1
jax: 0.10.0
libtpu: 0.0.40
codegen_flags: <defaults>
</compile_context>

<pallas_src>
import functools
import math

import jax
import jax.numpy as jnp
from jax import lax
from jax.experimental import pallas as pl
from jax.experimental.pallas import tpu as pltpu

GAMMA = 2.0
ALPHA = 0.25


def _round_up(x: int, m: int) -> int:
    return (x + m - 1) // m * m


# --------------------------------------------------------------------------
# Elementwise focal math (f32 in, f32 out).  `w` broadcasts against `x`.
# --------------------------------------------------------------------------
def _focal_math(x, t, w, gamma, alpha):
    e = jnp.exp(-jnp.abs(x))                 # reused by sigmoid AND log1p term
    inv = 1.0 / (1.0 + e)
    sig = jnp.where(x >= 0.0, inv, e * inv)  # numerically stable sigmoid(x)
    alpha_w = t * alpha + (1.0 - t) * (1.0 - alpha)
    pt = t * (1.0 - sig) + (1.0 - t) * sig
    if gamma == 2.0:
        pt_g = pt * pt                       # avoid exp(g*log(pt)) on the EUP
    elif float(gamma) == int(gamma) and gamma >= 0:
        pt_g = lax.integer_pow(pt, int(gamma))
    else:
        pt_g = jnp.power(pt, gamma)
    # max(x, 0) - x * t + log(1 + exp(-|x|))
    bce = jnp.maximum(x, 0.0) - x * t + jnp.log1p(e)
    return alpha_w * pt_g * bce * w


# --------------------------------------------------------------------------
# Lane-dense kernel: x/t/out blocks are (TR, L); `expand` (K, L) and the
# weights (resident mode) are loaded once and stay in VMEM across the grid.
# --------------------------------------------------------------------------
def _focal_kernel(x_ref, t_ref, w_ref, e_ref, o_ref, *,
                  gamma, alpha, tr, resident_w):
    x = x_ref[...].astype(jnp.float32)       # (TR, L)
    t = t_ref[...].astype(jnp.float32)       # (TR, L)
    if resident_w:
        start = pl.multiple_of(pl.program_id(0) * tr, tr)
        w = w_ref[pl.ds(start, tr), :].astype(jnp.float32)   # (TR, K)
    else:
        w = w_ref[...].astype(jnp.float32)                   # (TR, K)
    # Replicate each anchor weight across its C lanes via the (loop-invariant,
    # VMEM-resident) 0/1 expansion matrix on the otherwise-idle MXU.
    w_full = jnp.dot(w, e_ref[...], preferred_element_type=jnp.float32)
    o_ref[...] = _focal_math(x, t, w_full, gamma, alpha).astype(o_ref.dtype)


# --------------------------------------------------------------------------
# Tile chooser: ~2 MiB f32 per buffer, rows a multiple of 8, cdiv grid.
# --------------------------------------------------------------------------
def _choose_tile(R: int, L: int, budget_bytes: int = 2 * 1024 * 1024):
    rows = max(8, (budget_bytes // (4 * L)) // 8 * 8)
    if R <= rows:
        return R, 1                          # single full-extent block
    tr = rows
    steps = pl.cdiv(R, tr)
    # v7x megacore: prefer an even number of parallel grid steps (best effort).
    if steps % 2 == 1:
        tr2 = _round_up(pl.cdiv(R, steps + 1), 8)
        if tr2 >= 8 and pl.cdiv(R, tr2) % 2 == 0:
            tr = tr2
            steps = pl.cdiv(R, tr)
    return tr, steps


# --------------------------------------------------------------------------
# Public wrapper.
# --------------------------------------------------------------------------
def sigmoid_focal_classification_loss(logits, target, weights,
                                      gamma: float = GAMMA,
                                      alpha: float = ALPHA):
    """logits/target: (B, A, C) float; weights: (B, A) float -> (B, A, C)."""
    B, A, C = logits.shape
    assert target.shape == (B, A, C)
    assert weights.shape == (B, A)
    out_dtype = logits.dtype

    N = B * A
    K = 128 // math.gcd(C, 128)              # anchors grouped per lane-dense row
    L = K * C                                # multiple of 128 lanes
    R = pl.cdiv(N, K)
    N_pad = R * K

    x2 = logits.reshape(N, C)
    t2 = target.reshape(N, C)
    w1 = weights.reshape(N)
    if N_pad != N:
        # <= K-1 <= 127 extra anchors of HBM traffic -- noise for a mem-bound
        # kernel, and it lets every shape take the lane-dense path.
        pad = N_pad - N
        x2 = jnp.pad(x2, ((0, pad), (0, 0)))
        t2 = jnp.pad(t2, ((0, pad), (0, 0)))
        w1 = jnp.pad(w1, (0, pad))
    x2 = x2.reshape(R, L)
    t2 = t2.reshape(R, L)
    w2 = w1.reshape(R, K)

    TR, steps = _choose_tile(R, L)

    # Loop-invariant 0/1 expansion matrix E[i, j] = 1 iff lane j belongs to
    # anchor i.  Built once here; kept VMEM-resident via a constant index_map.
    lane = jnp.arange(L, dtype=jnp.int32)
    row = jnp.arange(K, dtype=jnp.int32)
    expand = (lane[None, :] // C == row[:, None]).astype(jnp.float32)

    # Keep the (tiny) per-anchor weights VMEM-resident when they fit (sliced
    # per step with pl.ds); otherwise stream one (TR, K) slab per step.
    rows_needed = steps * TR
    w_vmem_bytes = _round_up(rows_needed, 8) * 128 * 4   # lane-padded estimate
    resident_w = w_vmem_bytes <= 4 * 1024 * 1024
    if resident_w:
        if rows_needed != R:
            w2 = jnp.pad(w2, ((0, rows_needed - R), (0, 0)))
        w_spec = pl.BlockSpec((rows_needed, K), lambda r: (0, 0))
    else:
        w_spec = pl.BlockSpec((TR, K), lambda r: (r, 0))

    kernel = functools.partial(_focal_kernel, gamma=gamma, alpha=alpha,
                               tr=TR, resident_w=resident_w)

    nelem = N_pad * C
    itemsize = jnp.dtype(out_dtype).itemsize
    cost = pl.CostEstimate(
        flops=20 * nelem,
        transcendentals=2 * nelem,
        bytes_accessed=(3 * nelem + N_pad) * itemsize,
    )

    # NOTE: could add pipeline_mode=pl.Buffered(3) on x/t for v7x if DMA
    # latency shows up; keeping default double-buffering for portability.
    out2 = pl.pallas_call(
        kernel,
        out_shape=jax.ShapeDtypeStruct((R, L), out_dtype),
        grid_spec=pltpu.PrefetchScalarGridSpec(
            num_scalar_prefetch=0,
            grid=(steps,),
            in_specs=[
                pl.BlockSpec((TR, L), lambda r: (r, 0)),
                pl.BlockSpec((TR, L), lambda r: (r, 0)),
                w_spec,
                pl.BlockSpec((K, L), lambda r: (0, 0)),   # resident expand
            ],
            out_specs=pl.BlockSpec((TR, L), lambda r: (r, 0)),
        ),
        compiler_params=pltpu.CompilerParams(
            dimension_semantics=("parallel",),
            vmem_limit_bytes=32 * 1024 * 1024,
        ),
        cost_estimate=cost,
    )(x2, t2, w2, expand)

    out = out2.reshape(N_pad, C)
    if N_pad != N:
        out = out[:N]
    return out.reshape(B, A, C)


# --------------------------------------------------------------------------
# Pure-JAX reference (mirrors the PyTorch module) + self-test.
# --------------------------------------------------------------------------
def _reference(logits, target, weights, gamma=GAMMA, alpha=ALPHA):
    pred_sigmoid = jax.nn.sigmoid(logits)
    alpha_weight = target * alpha + (1.0 - target) * (1.0 - alpha)
    pt = target * (1.0 - pred_sigmoid) + (1.0 - target) * pred_sigmoid
    focal_weight = alpha_weight * jnp.power(pt, gamma)
    bce = (jnp.maximum(logits, 0.0) - logits * target
           + jnp.log1p(jnp.exp(-jnp.abs(logits))))
    return focal_weight * bce * weights[..., None]


if __name__ == "__main__":
    key = jax.random.PRNGKey(0)
    k1, k2, k3, k4, k5, k6 = jax.random.split(key, 6)

    # Case 1: nicely shaped lane-dense input (K=16 anchors per 128-lane row).
    B, A, C = 2, 256, 8
    logits = jax.random.normal(k1, (B, A, C), dtype=jnp.float32) * 2.0
    cls_idx = jax.random.randint(k2, (B, A), 0, C)
    target = jax.nn.one_hot(cls_idx, C, dtype=jnp.float32)
    weights = jax.random.uniform(k3, (B, A), dtype=jnp.float32)

    out = sigmoid_focal_classification_loss(logits, target, weights)
    out = jax.block_until_ready(out)
    ref = _reference(logits, target, weights)
    assert out.shape == (B, A, C)
    assert jnp.allclose(out, ref, atol=1e-5, rtol=1e-5), \
        float(jnp.max(jnp.abs(out - ref)))

    # Case 2: awkward shape (C=5, B*A not a multiple of K=128) -> exercises the
    # anchor-padding path that replaced the old low-lane-utilization fallback.
    B2, A2, C2 = 2, 37, 5
    logits2 = jax.random.normal(k4, (B2, A2, C2), dtype=jnp.float32) * 2.0
    cls_idx2 = jax.random.randint(k5, (B2, A2), 0, C2)
    target2 = jax.nn.one_hot(cls_idx2, C2, dtype=jnp.float32)
    weights2 = jax.random.uniform(k6, (B2, A2), dtype=jnp.float32)

    out2 = sigmoid_focal_classification_loss(logits2, target2, weights2)
    out2 = jax.block_until_ready(out2)
    ref2 = _reference(logits2, target2, weights2)
    assert out2.shape == (B2, A2, C2)
    assert jnp.allclose(out2, ref2, atol=1e-5, rtol=1e-5), \
        float(jnp.max(jnp.abs(out2 - ref2)))

    print("KERNEL_OK")
</pallas_src>

<mosaic_0001>
module attributes {stable_mosaic.version = 11 : i64} {
  func.func @_focal_kernel(%arg0: i32, %arg1: memref<32x128xf32, #tpu.memory_space<vmem>>, %arg2: memref<32x128xf32, #tpu.memory_space<vmem>>, %arg3: memref<32x16xf32, #tpu.memory_space<vmem>>, %arg4: memref<16x128xf32, #tpu.memory_space<vmem>>, %arg5: memref<32x128xf32, #tpu.memory_space<vmem>>) attributes {dimension_semantics = [#tpu.dimension_semantics<parallel>], iteration_bounds = array<i64: 1>, scalar_prefetch = 0 : i64, scratch_operands = 0 : i64, tpu.core_type = #tpu.core_type<tc>, window_params = [{transform_indices = @transform_0, window_bounds = array<i64: 32, 128>}, {transform_indices = @transform_1, window_bounds = array<i64: 32, 128>}, {pipeline_mode = #tpu.pipeline_mode<synchronous>, transform_indices = @transform_2, window_bounds = array<i64: 32, 16>}, {pipeline_mode = #tpu.pipeline_mode<synchronous>, transform_indices = @transform_3, window_bounds = array<i64: 16, 128>}, {transform_indices = @transform_4, window_bounds = array<i64: 32, 128>}]} {
    %c0 = arith.constant 0 : index
    %c0_0 = arith.constant 0 : index
    %0 = vector.load %arg1[%c0, %c0_0] : memref<32x128xf32, #tpu.memory_space<vmem>>, vector<32x128xf32>
    %c0_1 = arith.constant 0 : index
    %c0_2 = arith.constant 0 : index
    %1 = vector.load %arg2[%c0_1, %c0_2] : memref<32x128xf32, #tpu.memory_space<vmem>>, vector<32x128xf32>
    %c32_i32 = arith.constant 32 : i32
    %2 = arith.muli %arg0, %c32_i32 : i32
    %3 = tpu.assume_multiple %2, 32 : i32
    %4 = arith.index_cast %3 : i32 to index
    %c0_3 = arith.constant 0 : index
    %5 = vector.load %arg3[%4, %c0_3] : memref<32x16xf32, #tpu.memory_space<vmem>>, vector<32x16xf32>
    %c0_4 = arith.constant 0 : index
    %c0_5 = arith.constant 0 : index
    %6 = vector.load %arg4[%c0_4, %c0_5] : memref<16x128xf32, #tpu.memory_space<vmem>>, vector<16x128xf32>
    %cst = arith.constant dense<0.000000e+00> : vector<32x128xf32>
    %7 = tpu.matmul %5, %6, %cst {dimension_numbers = #tpu.dot_dimension_numbers<[1], [0], [0], [1], [0, 0, 1, 1], [], []>} : vector<32x16xf32>, vector<16x128xf32>, vector<32x128xf32> -> vector<32x128xf32>
    %8 = math.absf %0 : vector<32x128xf32>
    %cst_6 = arith.constant 0.000000e+00 : f32
    %9 = vector.broadcast %cst_6 : f32 to vector<32x128xf32>
    %10 = arith.subf %9, %8 : vector<32x128xf32>
    %11 = math.exp %10 : vector<32x128xf32>
    %cst_7 = arith.constant 1.000000e+00 : f32
    %12 = vector.broadcast %cst_7 : f32 to vector<32x128xf32>
    %13 = arith.addf %12, %11 : vector<32x128xf32>
    %cst_8 = arith.constant 1.000000e+00 : f32
    %14 = vector.broadcast %cst_8 : f32 to vector<32x128xf32>
    %15 = arith.divf %14, %13 : vector<32x128xf32>
    %cst_9 = arith.constant 0.000000e+00 : f32
    %16 = vector.broadcast %cst_9 : f32 to vector<32x128xf32>
    %17 = arith.cmpf oge, %0, %16 : vector<32x128xf32>
    %18 = arith.mulf %11, %15 : vector<32x128xf32>
    %19 = arith.select %17, %15, %18 : vector<32x128xi1>, vector<32x128xf32>
    %cst_10 = arith.constant 2.500000e-01 : f32
    %20 = vector.broadcast %cst_10 : f32 to vector<32x128xf32>
    %21 = arith.mulf %1, %20 : vector<32x128xf32>
    %cst_11 = arith.constant 1.000000e+00 : f32
    %22 = vector.broadcast %cst_11 : f32 to vector<32x128xf32>
    %23 = arith.subf %22, %1 : vector<32x128xf32>
    %cst_12 = arith.constant 7.500000e-01 : f32
    %24 = vector.broadcast %cst_12 : f32 to vector<32x128xf32>
    %25 = arith.mulf %23, %24 : vector<32x128xf32>
    %26 = arith.addf %21, %25 : vector<32x128xf32>
    %cst_13 = arith.constant 1.000000e+00 : f32
    %27 = vector.broadcast %cst_13 : f32 to vector<32x128xf32>
    %28 = arith.subf %27, %19 : vector<32x128xf32>
    %29 = arith.mulf %1, %28 : vector<32x128xf32>
    %cst_14 = arith.constant 1.000000e+00 : f32
    %30 = vector.broadcast %cst_14 : f32 to vector<32x128xf32>
    %31 = arith.subf %30, %1 : vector<32x128xf32>
    %32 = arith.mulf %31, %19 : vector<32x128xf32>
    %33 = arith.addf %29, %32 : vector<32x128xf32>
    %34 = arith.mulf %33, %33 : vector<32x128xf32>
    %cst_15 = arith.constant 0.000000e+00 : f32
    %35 = vector.broadcast %cst_15 : f32 to vector<32x128xf32>
    %36 = arith.maximumf %0, %35 : vector<32x128xf32>
    %37 = arith.mulf %0, %1 : vector<32x128xf32>
    %38 = arith.subf %36, %37 : vector<32x128xf32>
    %39 = math.log1p %11 : vector<32x128xf32>
    %40 = arith.addf %38, %39 : vector<32x128xf32>
    %41 = arith.mulf %26, %34 : vector<32x128xf32>
    %42 = arith.mulf %41, %40 : vector<32x128xf32>
    %43 = arith.mulf %42, %7 : vector<32x128xf32>
    %c0_16 = arith.constant 0 : index
    %c0_17 = arith.constant 0 : index
    %44 = vector.load %arg5[%c0_16, %c0_17] : memref<32x128xf32, #tpu.memory_space<vmem>>, vector<32x128xf32>
    tpu.vector_store %arg5[%c0_16, %c0_17], %43 {strides = array<i32>} : memref<32x128xf32, #tpu.memory_space<vmem>>, vector<32x128xf32>,
    return
  }
  func.func @transform_0(%arg0: i32) -> (i32, i32) {
    %c0_i32 = arith.constant 0 : i32
    %c0_i32_0 = arith.constant 0 : i32
    return %arg0, %c0_i32 : i32, i32
  }
  func.func @transform_1(%arg0: i32) -> (i32, i32) {
    %c0_i32 = arith.constant 0 : i32
    %c0_i32_0 = arith.constant 0 : i32
    return %arg0, %c0_i32 : i32, i32
  }
  func.func @transform_2(%arg0: i32) -> (i32, i32) {
    %c0_i32 = arith.constant 0 : i32
    %c0_i32_0 = arith.constant 0 : i32
    %c0_i32_1 = arith.constant 0 : i32
    return %c0_i32, %c0_i32_0 : i32, i32
  }
  func.func @transform_3(%arg0: i32) -> (i32, i32) {
    %c0_i32 = arith.constant 0 : i32
    %c0_i32_0 = arith.constant 0 : i32
    %c0_i32_1 = arith.constant 0 : i32
    return %c0_i32, %c0_i32_0 : i32, i32
  }
  func.func @transform_4(%arg0: i32) -> (i32, i32) {
    %c0_i32 = arith.constant 0 : i32
    %c0_i32_0 = arith.constant 0 : i32
    return %arg0, %c0_i32 : i32, i32
  }
}

</mosaic_0001>

<llo_original>
// kernel: tpu_custom_call.1
$region0: #{tpu_custom_call.1}
  #allocation0 [shape = 'u32[]', space=smem, size = 0x4, offset = 0x4, fixed_abs, tag = 'smem constant byte address 0x4 - core index']
  #allocation1 [shape = 'u32[144,128]{1,0:T(1,128)}', space=vmem, size = 0x12000, scoped, tag = 'internal scratch']
  %s0 = inlined_call_operand.vmem [shape: f32[32,128], index: 0, kind: input, shape index: {}]
  %s1 = inlined_call_operand.hbm [shape: f32[32,128], index: 1, kind: input, shape index: {}]
  %s2 = inlined_call_operand.vmem [shape: f32[32,16], index: 2, kind: input, shape index: {}]
  %s3 = inlined_call_operand.vmem [shape: f32[16,128], index: 3, kind: input, shape index: {}]
  %s4 = inlined_call_operand.hbm [shape: f32[32,128], index: 4, kind: output, shape index: {}]
  %s5 = sld [smem:[#allocation0]]
  $region30: #{tpu_custom_call.1} parent=0
    _
  %s7 = ssub.s32 1, %s5
  %s8 = scalar_select 0, %s7, %s5
  $region1: #{tpu_custom_call.1} parent=0
    #allocation2 [shape = 'u8[16384]{0}', space=vmem, size = 0x4000, scoped, tag = 'input window, operand 1, single buffered']
    #allocation3 [shape = 's32[1]{0}', space=sflag, size = 0x4, scoped, tag = 'scoped memory for tpu_custom_call.1']
    #allocation4 [shape = 's32[1]{0}', space=sflag, size = 0x4, scoped, tag = 'scoped memory for tpu_custom_call.1']
    #allocation5 [shape = 'u8[16384]{0}', space=vmem, size = 0x4000, scoped, tag = 'output window, operand 0, single buffered']
    %9 = vsyncpa [#allocation3], 0
    %10 = vsyncpa [#allocation4], 0
    // Predicated region
    $region2: #{tpu_custom_call.1} parent=1 // pred_check
      _
    $region3: #{tpu_custom_call.1} parent=1 // pred_check_branch
      %12 = sbr.rel (0) target = $region5
    $region4: #{tpu_custom_call.1} parent=1 // pred_region
      _
    $region5: #{tpu_custom_call.1} parent=1 // pred_fallthru
      _
    // Predicated region
    $region6: #{tpu_custom_call.1} parent=1 // pred_check
      _
    $region7: #{tpu_custom_call.1} parent=1 // pred_check_branch
      %14 = sbr.rel (0) target = $region9
    $region8: #{tpu_custom_call.1} parent=1 // pred_region
      %s16 = ssub.s32 512, 512
      %17 = vsyncadd [#allocation3], %s16
      %s18 = sshll.u32 [#allocation2], 4
      %s19 = int_to_ptr.vmem [resolvable:$true] %s18
      %24 = dma.hbm_to_vmem [thread:$0]  %s1, 512, %s19, [#allocation3], 128, 128, 8
    $region9: #{tpu_custom_call.1} parent=1 // pred_fallthru
      _
    // Predicated region
    $region10: #{tpu_custom_call.1} parent=1 // pred_check
      _
    $region11: #{tpu_custom_call.1} parent=1 // pred_check_branch
      %26 = sbr.rel (0) target = $region13
    $region12: #{tpu_custom_call.1} parent=1 // pred_region
      _
    $region13: #{tpu_custom_call.1} parent=1 // pred_fallthru
      _
    // Predicated region
    $region14: #{tpu_custom_call.1} parent=1 // pred_check
      _
    $region15: #{tpu_custom_call.1} parent=1 // pred_check_branch
      %28 = sbr.rel (0) target = $region17
    $region16: #{tpu_custom_call.1} parent=1 // pred_region
      _
    $region17: #{tpu_custom_call.1} parent=1 // pred_fallthru
      _
    // Predicated region
    $region18: #{tpu_custom_call.1} parent=1 // pred_check
      _
    $region19: #{tpu_custom_call.1} parent=1 // pred_check_branch
      %30 = sbr.rel (0) target = $region21
    $region20: #{tpu_custom_call.1} parent=1 // pred_region
      %31 = dma.done [#allocation3], 512
    $region21: #{tpu_custom_call.1} parent=1 // pred_fallthru
      _
    %v32 = vld [vmem:[%s0] sm:$0xff]
    %v33 = vld [vmem:[%s0 + $0x8] sm:$0xff]
    %v34 = vld [vmem:[%s0 + $0x10] sm:$0xff]
    %v35 = vld [vmem:[%s0 + $0x18] sm:$0xff]
    %v36 = vld [vmem:[#allocation2] sm:$0xff]
    %v37 = vld [vmem:[#allocation2 + $0x8] sm:$0xff]
    %v38 = vld [vmem:[#allocation2 + $0x10] sm:$0xff]
    %v39 = vld [vmem:[#allocation2 + $0x18] sm:$0xff]
    %s40 = smul.u32 0, 32
    %s41 = scalar_lea.vmem %s2, %s40
    %v42 = vld [vmem:[%s41] sm:$0xff]
    %v43 = vld [vmem:[%s41 + $0x8] sm:$0xff]
    %v44 = vld [vmem:[%s41 + $0x10] sm:$0xff]
    %v45 = vld [vmem:[%s41 + $0x18] sm:$0xff]
    %v46 = vld [vmem:[%s3] sm:$0xff]
    %v47 = vld [vmem:[%s3 + $0x8] sm:$0xff]
    %vm48 = vcmask 130048
    %v50 = vsel %vm48, %v42, 0
    %v53 = vsel %vm48, %v43, 0
    %v56 = vsel %vm48, %v44, 0
    %v59 = vsel %vm48, %v45, 0
    %61 = vmatprep.subr.mxu0 0.0
    %62 = vmatpush1.msra.mxu0 %v46
    %63 = vmatprep.subr.mxu0 0.0
    %64 = vmatpush1.msra.mxu0 %v47
    %65 = vmatprep.subr.mxu0 0.0
    %66 = vmatpush1.msra.mxu0 0.0
    %67 = vmatprep.subr.mxu0 0.0
    %68 = vmatpush1.msra.mxu0 0.0
    %69 = vmatprep.subr.mxu0 0.0
    %70 = vmatpush1.msra.mxu0 0.0
    %71 = vmatprep.subr.mxu0 0.0
    %72 = vmatpush1.msra.mxu0 0.0
    %73 = vmatprep.subr.mxu0 0.0
    %74 = vmatpush1.msra.mxu0 0.0
    %75 = vmatprep.subr.mxu0 0.0
    %76 = vmatpush1.msra.mxu0 0.0
    %77 = vmatprep.subr.mxu0 0.0
    %78 = vmatpush1.msra.mxu0 0.0
    %79 = vmatprep.subr.mxu0 0.0
    %80 = vmatpush1.msra.mxu0 0.0
    %81 = vmatprep.subr.mxu0 0.0
    %82 = vmatpush1.msra.mxu0 0.0
    %83 = vmatprep.subr.mxu0 0.0
    %84 = vmatpush1.msra.mxu0 0.0
    %85 = vmatprep.subr.mxu0 0.0
    %86 = vmatpush1.msra.mxu0 0.0
    %87 = vmatprep.subr.mxu0 0.0
    %88 = vmatpush1.msra.mxu0 0.0
    %89 = vmatprep.subr.mxu0 0.0
    %90 = vmatpush1.msra.mxu0 0.0
    %91 = vmatprep.subr.mxu0 0.0
    %92 = vmatpush1.msra.mxu0 0.0
    %93 = vmatprep.subr.mxu0 0.0
    %94 = vmatpush1.msra.mxu0 0.0
    %95 = vmatprep.subr.mxu0 0.0
    %96 = vmatpush1.msra.mxu0 0.0
    %97 = vmatprep.subr.mxu0 0.0
    %98 = vmatpush1.msra.mxu0 0.0
    %99 = vmatprep.subr.mxu0 0.0
    %100 = vmatpush1.msra.mxu0 0.0
    %101 = vmatprep.subr.mxu0 0.0
    %102 = vmatpush1.msra.mxu0 0.0
    %103 = vmatprep.subr.mxu0 0.0
    %104 = vmatpush1.msra.mxu0 0.0
    %105 = vmatprep.subr.mxu0 0.0
    %106 = vmatpush1.msra.mxu0 0.0
    %107 = vmatprep.subr.mxu0 0.0
    %108 = vmatpush1.msra.mxu0 0.0
    %109 = vmatprep.subr.mxu0 0.0
    %110 = vmatpush1.msra.mxu0 0.0
    %111 = vmatprep.subr.mxu0 0.0
    %112 = vmatpush1.msra.mxu0 0.0
    %113 = vmatprep.subr.mxu0 0.0
    %114 = vmatpush1.msra.mxu0 0.0
    %115 = vmatprep.subr.mxu0 0.0
    %116 = vmatpush1.msra.mxu0 0.0
    %117 = vmatprep.subr.mxu0 0.0
    %118 = vmatpush1.msra.mxu0 0.0
    %119 = vmatprep.subr.mxu0 0.0
    %120 = vmatpush1.msra.mxu0 0.0
    %121 = vmatprep.subr.mxu0 0.0
    %122 = vmatpush1.msra.mxu0 0.0
    %123 = vmatprep.subr.mxu0 0.0
    %124 = vmatpush1.msra.mxu0 0.0
    %125 = vmatprep.mubr.f32.mxu0 0.0
    %126 = vmatmul.mubr.f32.gmra.mrb[0].mxu0 %v50
    %v127 = vpop.f32.mrb[0].mxu0
    %v128 = vadd.f32 0.0, %v127
    %v129 = vpop.f32.mrb[0].mxu0
    %130 = vmatprep.mubr.f32.mxu0 0.0
    %131 = vmatmul.mubr.f32.gmra.mrb[0].mxu0 %v53
    %v132 = vpop.f32.mrb[0].mxu0
    %v133 = vadd.f32 0.0, %v132
    %v134 = vpop.f32.mrb[0].mxu0
    %135 = vmatprep.mubr.f32.mxu0 0.0
    %136 = vmatmul.mubr.f32.gmra.mrb[0].mxu0 %v56
    %v137 = vpop.f32.mrb[0].mxu0
    %v138 = vadd.f32 0.0, %v137
    %v139 = vpop.f32.mrb[0].mxu0
    %140 = vmatprep.mubr.f32.mxu0 0.0
    %141 = vmatmul.mubr.f32.gmra.mrb[0].mxu0 %v59
    %v142 = vpop.f32.mrb[0].mxu0
    %v143 = vadd.f32 0.0, %v142
    %v144 = vpop.f32.mrb[0].mxu0
    %145 = vdwg.mxu0
    %v146 = vand.u32 2147483647, %v32
    %v147 = vand.u32 2147483647, %v33
    %v148 = vand.u32 2147483647, %v34
    %v149 = vand.u32 2147483647, %v35
    %v150 = vsub.f32 0.0, %v146
    %v151 = vsub.f32 0.0, %v147
    %v152 = vsub.f32 0.0, %v148
    %v153 = vsub.f32 0.0, %v149
    %v154 = vmul.f32 %v150, 1.442695
    %v155 = vpow.pop %v154
    %v156 = vmul.f32 %v151, 1.442695
    %v157 = vpow.pop %v156
    %v158 = vmul.f32 %v152, 1.442695
    %v159 = vpow.pop %v158
    %v160 = vmul.f32 %v153, 1.442695
    %v161 = vpow.pop %v160
    %v162 = vadd.f32 %v155, 1.0
    %v163 = vadd.f32 %v157, 1.0
    %v164 = vadd.f32 %v159, 1.0
    %v165 = vadd.f32 %v161, 1.0
    %v166 = vrcp.pop %v162
    %v167 = vmul.f32 1.0, %v166
    %v168 = vrcp.pop %v163
    %v169 = vmul.f32 1.0, %v168
    %v170 = vrcp.pop %v164
    %v171 = vmul.f32 1.0, %v170
    %v172 = vrcp.pop %v165
    %v173 = vmul.f32 1.0, %v172
    %vm174 = vcmp.ge.f32.partialorder %v32, 0.0
    %vm175 = vcmp.ge.f32.partialorder %v33, 0.0
    %vm176 = vcmp.ge.f32.partialorder %v34, 0.0
    %vm177 = vcmp.ge.f32.partialorder %v35, 0.0
    %v178 = vmul.f32 %v155, %v167
    %v179 = vmul.f32 %v157, %v169
    %v180 = vmul.f32 %v159, %v171
    %v181 = vmul.f32 %v161, %v173
    %v182 = vsel %vm174, %v167, %v178
    %v183 = vsel %vm175, %v169, %v179
    %v184 = vsel %vm176, %v171, %v180
    %v185 = vsel %vm177, %v173, %v181
    %v186 = vmul.f32 %v36, 0.25
    %v187 = vmul.f32 %v37, 0.25
    %v188 = vmul.f32 %v38, 0.25
    %v189 = vmul.f32 %v39, 0.25
    %v190 = vsub.f32 1.0, %v36
    %v191 = vsub.f32 1.0, %v37
    %v192 = vsub.f32 1.0, %v38
    %v193 = vsub.f32 1.0, %v39
    %v194 = vmul.f32 %v190, 0.75
    %v195 = vmul.f32 %v191, 0.75
    %v196 = vmul.f32 %v192, 0.75
    %v197 = vmul.f32 %v193, 0.75
    %v198 = vadd.f32 %v186, %v194
    %v199 = vadd.f32 %v187, %v195
    %v200 = vadd.f32 %v188, %v196
    %v201 = vadd.f32 %v189, %v197
    %v202 = vsub.f32 1.0, %v182
    %v203 = vsub.f32 1.0, %v183
    %v204 = vsub.f32 1.0, %v184
    %v205 = vsub.f32 1.0, %v185
    %v206 = vmul.f32 %v36, %v202
    %v207 = vmul.f32 %v37, %v203
    %v208 = vmul.f32 %v38, %v204
    %v209 = vmul.f32 %v39, %v205
    %v210 = vmul.f32 %v190, %v182
    %v211 = vmul.f32 %v191, %v183
    %v212 = vmul.f32 %v192, %v184
    %v213 = vmul.f32 %v193, %v185
    %v214 = vadd.f32 %v206, %v210
    %v215 = vadd.f32 %v207, %v211
    %v216 = vadd.f32 %v208, %v212
    %v217 = vadd.f32 %v209, %v213
    %v218 = vmul.f32 %v214, %v214
    %v219 = vmul.f32 %v215, %v215
    %v220 = vmul.f32 %v216, %v216
    %v221 = vmul.f32 %v217, %v217
    %v222 = vmax.f32 %v32, 0.0
    %v223 = vmax.f32 %v33, 0.0
    %v224 = vmax.f32 %v34, 0.0
    %v225 = vmax.f32 %v35, 0.0
    %v226 = vmul.f32 %v32, %v36
    %v227 = vmul.f32 %v33, %v37
    %v228 = vmul.f32 %v34, %v38
    %v229 = vmul.f32 %v35, %v39
    %v230 = vsub.f32 %v222, %v226
    %v231 = vsub.f32 %v223, %v227
    %v232 = vsub.f32 %v224, %v228
    %v233 = vsub.f32 %v225, %v229
    %v234 = vadd.f32 %v155, 1.0
    %v235 = vlog2.pop %v234
    %v236 = vmul.f32 %v235, 0.6931472
    %v237 = vmul.f32 -0.5, %v155
    %v238 = vadd.f32 %v237, 1.0
    %v239 = vmul.f32 %v238, %v155
    %v240 = vand.u32 2147483647, %v155
    %vm241 = vcmp.lt.f32.partialorder %v240, 0.0004427343
    %v242 = vsel %vm241, %v239, %v236
    %v243 = vadd.f32 %v157, 1.0
    %v244 = vlog2.pop %v243
    %v245 = vmul.f32 %v244, 0.6931472
    %v246 = vmul.f32 -0.5, %v157
    %v247 = vadd.f32 %v246, 1.0
    %v248 = vmul.f32 %v247, %v157
    %v249 = vand.u32 2147483647, %v157
    %vm250 = vcmp.lt.f32.partialorder %v249, 0.0004427343
    %v251 = vsel %vm250, %v248, %v245
    %v252 = vadd.f32 %v159, 1.0
    %v253 = vlog2.pop %v252
    %v254 = vmul.f32 %v253, 0.6931472
    %v255 = vmul.f32 -0.5, %v159
    %v256 = vadd.f32 %v255, 1.0
    %v257 = vmul.f32 %v256, %v159
    %v258 = vand.u32 2147483647, %v159
    %vm259 = vcmp.lt.f32.partialorder %v258, 0.0004427343
    %v260 = vsel %vm259, %v257, %v254
    %v261 = vadd.f32 %v161, 1.0
    %v262 = vlog2.pop %v261
    %v263 = vmul.f32 %v262, 0.6931472
    %v264 = vmul.f32 -0.5, %v161
    %v265 = vadd.f32 %v264, 1.0
    %v266 = vmul.f32 %v265, %v161
    %v267 = vand.u32 2147483647, %v161
    %vm268 = vcmp.lt.f32.partialorder %v267, 0.0004427343
    %v269 = vsel %vm268, %v266, %v263
    %v270 = vadd.f32 %v230, %v242
    %v271 = vadd.f32 %v231, %v251
    %v272 = vadd.f32 %v232, %v260
    %v273 = vadd.f32 %v233, %v269
    %v274 = vmul.f32 %v198, %v218
    %v275 = vmul.f32 %v199, %v219
    %v276 = vmul.f32 %v200, %v220
    %v277 = vmul.f32 %v201, %v221
    %v278 = vmul.f32 %v274, %v270
    %v279 = vmul.f32 %v275, %v271
    %v280 = vmul.f32 %v276, %v272
    %v281 = vmul.f32 %v277, %v273
    %v282 = vmul.f32 %v278, %v128
    %v283 = vmul.f32 %v279, %v133
    %v284 = vmul.f32 %v280, %v138
    %v285 = vmul.f32 %v281, %v143
    %286 = vst [vmem:[#allocation5] sm:$0xff] %v282
    %287 = vst [vmem:[#allocation5 + $0x8] sm:$0xff] %v283
    %288 = vst [vmem:[#allocation5 + $0x10] sm:$0xff] %v284
    %289 = vst [vmem:[#allocation5 + $0x18] sm:$0xff] %v285
    // Predicated region
    $region22: #{tpu_custom_call.1} parent=1 // pred_check
      _
    $region23: #{tpu_custom_call.1} parent=1 // pred_check_branch
      %291 = sbr.rel (0) target = $region25
    $region24: #{tpu_custom_call.1} parent=1 // pred_region
      %s293 = ssub.s32 512, 512
      %294 = vsyncadd [#allocation4], %s293
      %s295 = sshll.u32 [#allocation5], 4
      %s296 = int_to_ptr.vmem [resolvable:$true] %s295
      %301 = dma.vmem_to_hbm [thread:$0]  %s296, 512, %s4, [#allocation4], 128, 128, 8
    $region25: #{tpu_custom_call.1} parent=1 // pred_fallthru
      _
    // Predicated region
    $region26: #{tpu_custom_call.1} parent=1 // pred_check
      _
    $region27: #{tpu_custom_call.1} parent=1 // pred_check_branch
      %303 = sbr.rel (0) target = $region29
    $region28: #{tpu_custom_call.1} parent=1 // pred_region
      %304 = dma.done [#allocation4], 512
    $region29: #{tpu_custom_call.1} parent=1 // pred_fallthru
      _
    %305 = vsyncpa [#allocation3], 1
    %306 = vsyncpa [#allocation4], 1

</llo_original>
